<compile_context>
chip_gen: v7x
topology: tpu7x:2x2x1
jax: 0.10.0
libtpu: 0.0.40
codegen_flags: <defaults>
</compile_context>

<pallas_src>
import jax
import jax.numpy as jnp
from jax.experimental import pallas as pl
from jax.experimental.pallas import tpu as pltpu


def _broadcast_template_kernel(tmpl_ref, o_ref):
    # tmpl_ref: (1, F) flattened template (same block every step)
    # o_ref:    (batch_block, F) slab of the flattened output
    o_ref[...] = jnp.broadcast_to(tmpl_ref[...], o_ref.shape)


def mock_model_forward(x, output_template, *, batch_block=1024):
    """Pallas implementation of MockModel.forward.

    x: any array whose leading dim is the batch size (values unused).
    output_template: (3, 10, 10) float32 constant (self.output).
    Returns: (B, 3, 10, 10) float32.
    """
    batch = x.shape[0]
    c, h, w = output_template.shape
    feat = c * h * w  # 300 — lane-dense last axis for the store path

    tmpl2d = output_template.reshape(1, feat)

    bb = min(batch, batch_block)
    grid = (pl.cdiv(batch, bb),)  # (1,) for any realistic test batch size

    out2d = pl.pallas_call(
        _broadcast_template_kernel,
        out_shape=jax.ShapeDtypeStruct((batch, feat), output_template.dtype),
        grid_spec=pltpu.PrefetchScalarGridSpec(
            num_scalar_prefetch=0,
            grid=grid,
            in_specs=[
                # single (1, 300) template block; block dims equal the full
                # array dims, so the (8, 128) tiling rule is satisfied.
                pl.BlockSpec((1, feat), lambda i: (0, 0)),
            ],
            out_specs=pl.BlockSpec((bb, feat), lambda i: (i, 0)),
        ),
        compiler_params=pltpu.CompilerParams(
            # Only matters when batch > batch_block (big chunks per core);
            # with grid=(1,) it is a no-op.
            dimension_semantics=("parallel",)
        ),
    )(tmpl2d)

    # Wrapper-side reshape back to the PyTorch NCHW output layout.
    return out2d.reshape(batch, c, h, w)


def init_mock_model_params(key):
    """Deterministic parameter init mirroring MockModel.__init__.

    nn.Linear(10, 1): weight (1, 10), bias (1,) — unused in forward, but
    initialized for fidelity with the module's parameter set.
    self.output default: zeros((3, 10, 10), float32).
    """
    kw, kb = jax.random.split(key)
    bound = 1.0 / jnp.sqrt(10.0)
    params = {
        "mock_layer": {
            "weight": jax.random.uniform(kw, (1, 10), jnp.float32, -bound, bound),
            "bias": jax.random.uniform(kb, (1,), jnp.float32, -bound, bound),
        },
        "output": jnp.zeros((3, 10, 10), dtype=jnp.float32),
    }
    return params


if __name__ == "__main__":
    key = jax.random.PRNGKey(0)
    k_params, k_x = jax.random.split(key)

    params = init_mock_model_params(k_params)

    # Input consistent with Linear(10, 1): (batch=2, features=10).
    x = jax.random.normal(k_x, (2, 10), dtype=jnp.float32)

    out = mock_model_forward(x, params["output"])
    out = jax.block_until_ready(out)

    # Reference check: forward stacks the (zero) template B times.
    ref = jnp.broadcast_to(params["output"][None], (x.shape[0], 3, 10, 10))
    assert out.shape == (2, 3, 10, 10), out.shape
    assert out.dtype == jnp.float32, out.dtype
    assert jnp.array_equal(out, ref), "mismatch vs reference broadcast"

    # TODO(synk): `output.requires_grad = True` has no Pallas/JAX analogue
    # (autograd tracking is implicit in JAX transformations).
    print("KERNEL_OK")
</pallas_src>

<mosaic_0001>
module attributes {stable_mosaic.version = 11 : i64} {
  func.func @_broadcast_template_kernel(%arg0: i32, %arg1: memref<1x300xf32, #tpu.memory_space<vmem>>, %arg2: memref<2x300xf32, #tpu.memory_space<vmem>>) attributes {dimension_semantics = [#tpu.dimension_semantics<parallel>], iteration_bounds = array<i64: 1>, scalar_prefetch = 0 : i64, scratch_operands = 0 : i64, tpu.core_type = #tpu.core_type<tc>, window_params = [{pipeline_mode = #tpu.pipeline_mode<synchronous>, transform_indices = @transform_0, window_bounds = array<i64: 1, 300>}, {transform_indices = @transform_1, window_bounds = array<i64: 2, 300>}]} {
    %c0 = arith.constant 0 : index
    %c0_0 = arith.constant 0 : index
    %0 = vector.load %arg1[%c0, %c0_0] : memref<1x300xf32, #tpu.memory_space<vmem>>, vector<1x300xf32>
    %1 = vector.shape_cast %0 : vector<1x300xf32> to vector<1x300xf32>
    %2 = vector.broadcast %1 : vector<1x300xf32> to vector<2x300xf32>
    %c0_1 = arith.constant 0 : index
    %c0_2 = arith.constant 0 : index
    %3 = vector.load %arg2[%c0_1, %c0_2] : memref<2x300xf32, #tpu.memory_space<vmem>>, vector<2x300xf32>
    tpu.vector_store %arg2[%c0_1, %c0_2], %2 {strides = array<i32>} : memref<2x300xf32, #tpu.memory_space<vmem>>, vector<2x300xf32>,
    return
  }
  func.func @transform_0(%arg0: i32) -> (i32, i32) {
    %c0_i32 = arith.constant 0 : i32
    %c0_i32_0 = arith.constant 0 : i32
    %c0_i32_1 = arith.constant 0 : i32
    return %c0_i32, %c0_i32_0 : i32, i32
  }
  func.func @transform_1(%arg0: i32) -> (i32, i32) {
    %c0_i32 = arith.constant 0 : i32
    %c0_i32_0 = arith.constant 0 : i32
    return %arg0, %c0_i32 : i32, i32
  }
}

</mosaic_0001>

<llo_original>
// kernel: tpu_custom_call.1
$region0: #{tpu_custom_call.1}
  #allocation0 [shape = 'u32[]', space=smem, size = 0x4, offset = 0x4, fixed_abs, tag = 'smem constant byte address 0x4 - core index']
  #allocation1 [shape = 'u32[144,128]{1,0:T(1,128)}', space=vmem, size = 0x12000, scoped, tag = 'internal scratch']
  %s0 = inlined_call_operand.hbm [shape: f32[1,300], index: 0, kind: input, shape index: {}]
  %s1 = inlined_call_operand.hbm [shape: f32[2,300], index: 1, kind: output, shape index: {}]
  %s2 = sld [smem:[#allocation0]]
  $region18: #{tpu_custom_call.1} parent=0
    _
  %s4 = ssub.s32 1, %s2
  %s5 = scalar_select 0, %s4, %s2
  $region1: #{tpu_custom_call.1} parent=0
    #allocation2 [shape = 'u8[1536]{0}', space=vmem, size = 0x800, scoped, tag = 'input window, operand 0, single buffered']
    #allocation3 [shape = 's32[1]{0}', space=sflag, size = 0x4, scoped, tag = 'scoped memory for tpu_custom_call.1']
    #allocation4 [shape = 's32[1]{0}', space=sflag, size = 0x4, scoped, tag = 'scoped memory for tpu_custom_call.1']
    #allocation5 [shape = 'u8[3072]{0}', space=vmem, size = 0xc00, scoped, tag = 'output window, operand 0, single buffered']
    %6 = vsyncpa [#allocation3], 0
    %7 = vsyncpa [#allocation4], 0
    // Predicated region
    $region2: #{tpu_custom_call.1} parent=1 // pred_check
      _
    $region3: #{tpu_custom_call.1} parent=1 // pred_check_branch
      %9 = sbr.rel (0) target = $region5
    $region4: #{tpu_custom_call.1} parent=1 // pred_region
      %s11 = ssub.s32 48, 48
      %12 = vsyncadd [#allocation3], %s11
      %s14 = sshll.u32 [#allocation2], 4
      %s15 = int_to_ptr.vmem [resolvable:$true] %s14
      %17 = dma.hbm_to_vmem [thread:$0]  %s0, 48, %s15, [#allocation3]
    $region5: #{tpu_custom_call.1} parent=1 // pred_fallthru
      _
    // Predicated region
    $region6: #{tpu_custom_call.1} parent=1 // pred_check
      _
    $region7: #{tpu_custom_call.1} parent=1 // pred_check_branch
      %19 = sbr.rel (0) target = $region9
    $region8: #{tpu_custom_call.1} parent=1 // pred_region
      %20 = dma.done [#allocation3], 48
    $region9: #{tpu_custom_call.1} parent=1 // pred_fallthru
      _
    %v21 = vld [vmem:[#allocation2] sm:$0x7]
    %v23 = vlaneseq
    %v24 = vshrl.u32 %v23, 7
    %v25 = vsub.s32 0, %v24
    %v26 = vrot.slane %v21, %v25
    %v27 = vlaneseq
    %v28 = vshrl.u32 %v27, 7
    %v29 = vsub.s32 1, %v28
    %v30 = vrot.slane %v21, %v29
    %v31 = vlaneseq
    %v32 = vshrl.u32 %v31, 7
    %v33 = vsub.s32 2, %v32
    %v34 = vrot.slane %v21, %v33
    %v35 = vcombine.low %v26, %v30
    %v37 = vunpack.c.l.s4 1983009808
    %v38 = vunpack.c.0.s8 %v37
    %v39 = vlaneseq
    %v40 = vshrl.u32 %v39, 7
    %v41 = vsub.s32 %v38, %v40
    %v42 = vrot.slane %v35, %v41
    %v44 = vunpack.c.l.s4 1983009808
    %v45 = vunpack.c.0.s8 %v44
    %v46 = vlaneseq
    %v47 = vshrl.u32 %v46, 7
    %v48 = vsub.s32 %v45, %v47
    %v49 = vrot.slane %v34, %v48
    %v50 = vcombine.low %v42, %v49
    %vm52 = vcmask 1041408
    %vm53 = vcmask 1043458
    %vm54 = vmor %vm53, %vm52
    %vm55 = vcmask 357380
    %vm56 = vmor %vm55, %vm54
    %57 = vst.msk [vmem:[#allocation5] sm:$0x3f] %vm56, %v50
    // Predicated region
    $region10: #{tpu_custom_call.1} parent=1 // pred_check
      _
    $region11: #{tpu_custom_call.1} parent=1 // pred_check_branch
      %59 = sbr.rel (0) target = $region13
    $region12: #{tpu_custom_call.1} parent=1 // pred_region
      %s61 = ssub.s32 96, 96
      %62 = vsyncadd [#allocation4], %s61
      %s64 = sshll.u32 [#allocation5], 4
      %s65 = int_to_ptr.vmem [resolvable:$true] %s64
      %67 = dma.vmem_to_hbm [thread:$0]  %s65, 96, %s1, [#allocation4]
    $region13: #{tpu_custom_call.1} parent=1 // pred_fallthru
      _
    // Predicated region
    $region14: #{tpu_custom_call.1} parent=1 // pred_check
      _
    $region15: #{tpu_custom_call.1} parent=1 // pred_check_branch
      %69 = sbr.rel (0) target = $region17
    $region16: #{tpu_custom_call.1} parent=1 // pred_region
      %70 = dma.done [#allocation4], 96
    $region17: #{tpu_custom_call.1} parent=1 // pred_fallthru
      _
    %71 = vsyncpa [#allocation3], 1
    %72 = vsyncpa [#allocation4], 1

</llo_original>
